<compile_context>
chip_gen: v5e
topology: v5e:2x2
jax: 0.10.0
libtpu: 0.0.40
codegen_flags: <defaults>
</compile_context>

<pallas_src>
from functools import partial

import numpy as np
import jax
import jax.numpy as jnp
from jax import lax
from jax.experimental import pallas as pl
from jax.experimental.pallas import tpu as pltpu

NUM_VIEWS = 13
IN_FEATS = 45          # 1*3*15
C1_PAD = 512           # conv1 output 10*3*15 = 450 -> padded to 512
C2_PAD = 256           # conv2 output 10*13   = 130 -> padded to 256
C3_PAD = 128           # conv3 output 13            -> padded to 128
MAX_SINGLE_TILE = 1024


# ------------------------------ device heuristics ----------------------------
def _device_kind():
    try:
        return jax.devices()[0].device_kind.lower()
    except Exception:
        return ""


def _use_bf16_epilogue(kind=None):
    """bf16 VALU exists on v6e / v7x; keep f32 elementwise epilogues elsewhere."""
    kind = _device_kind() if kind is None else kind
    return ("v6" in kind) or ("v7" in kind)


def _choose_tile_b(b, prefer_even_grid=False):
    """Row-tile selection: single block for small batches; otherwise the tile from
    {1024,512,256} minimizing dead rows in the partial last block (pure MXU waste),
    with an even-grid preference on v7x (two TensorCores split the parallel axis)."""
    if b <= MAX_SINGLE_TILE:
        return b
    best_key, best_t = None, None
    for t in (1024, 512, 256):
        steps = -(-b // t)
        waste = steps * t - b
        key = (waste, (steps % 2) if prefer_even_grid else 0, steps)
        if best_key is None or key < best_key:
            best_key, best_t = key, t
    return best_t


# ----------------------------- Pallas kernel --------------------------------
def triple_mnist_kernel(x_ref, w1_ref, b1_ref, w2_ref, b2_ref, w3_ref, b3_ref,
                        o_ref, *, bf16_epilogue):
    # conv1 (Toeplitz matmul): f32 input cast to bf16 in-kernel, f32 accumulation.
    h = jnp.dot(x_ref[...].astype(jnp.bfloat16), w1_ref[...],
                preferred_element_type=jnp.float32)                 # (tb, 512)
    if bf16_epilogue:
        h = jnp.maximum(h.astype(jnp.bfloat16) + b1_ref[...].astype(jnp.bfloat16), 0)
    else:
        h = jnp.maximum(h + b1_ref[...], 0.0).astype(jnp.bfloat16)

    # conv2                                                          -> (tb, 256)
    h = jnp.dot(h, w2_ref[...], preferred_element_type=jnp.float32)
    if bf16_epilogue:
        h = jnp.maximum(h.astype(jnp.bfloat16) + b2_ref[...].astype(jnp.bfloat16), 0)
    else:
        h = jnp.maximum(h + b2_ref[...], 0.0).astype(jnp.bfloat16)

    # conv3 (narrow, keep f32 for the softmax)                       -> (tb, 128)
    h = jnp.dot(h, w3_ref[...], preferred_element_type=jnp.float32)
    h = jnp.maximum(h + b3_ref[...], 0.0)

    # softmax over the 13 real lanes. Padded lanes are structurally 0 and the real
    # logits are >= 0 post-ReLU, so the unmasked 128-lane max is already the real max;
    # only the exponentials on padded lanes need masking.
    lane = lax.broadcasted_iota(jnp.int32, h.shape, 1)
    m = jnp.max(h, axis=-1, keepdims=True)
    e = jnp.where(lane < NUM_VIEWS, jnp.exp(h - m), 0.0)
    inv = pl.reciprocal(jnp.sum(e, axis=-1, keepdims=True), approx=True)
    w = e * inv                                       # zeros on padded lanes

    # expected view coordinate: sum_i w_i * i with positions 0..12
    coord = jnp.sum(w * lane.astype(jnp.float32), axis=-1, keepdims=True)

    # lane-dense bf16 output slab: lanes 0..12 = softmax weights, lane 13 = coord
    o_ref[...] = jnp.where(lane == NUM_VIEWS, coord, w).astype(o_ref.dtype)


def triple_mnist_forward(x, dense_params, *, bf16_epilogue=None):
    """x: any shape whose element count is divisible by 45 (like the torch view)."""
    w1, b1, w2, b2, w3, b3 = dense_params
    x_flat = x.reshape(-1, IN_FEATS)
    b = x_flat.shape[0]

    kind = _device_kind()
    if bf16_epilogue is None:
        bf16_epilogue = _use_bf16_epilogue(kind)
    tile_b = _choose_tile_b(b, prefer_even_grid=("v7" in kind))
    steps = -(-b // tile_b)
    rows = steps * tile_b

    w_bytes = 2 * (IN_FEATS * C1_PAD + C1_PAD * C2_PAD + C2_PAD * C3_PAD) \
        + 4 * (C1_PAD + C2_PAD + C3_PAD)
    cost = pl.CostEstimate(
        flops=2 * rows * (IN_FEATS * C1_PAD + C1_PAD * C2_PAD + C2_PAD * C3_PAD),
        transcendentals=rows * C3_PAD,
        bytes_accessed=b * IN_FEATS * x_flat.dtype.itemsize + w_bytes + b * C3_PAD * 2,
    )

    out = pl.pallas_call(
        partial(triple_mnist_kernel, bf16_epilogue=bf16_epilogue),
        out_shape=jax.ShapeDtypeStruct((b, C3_PAD), jnp.bfloat16),
        grid=(steps,),
        in_specs=[
            pl.BlockSpec((tile_b, IN_FEATS), lambda i: (i, 0)),   # activations: tiled
            pl.BlockSpec((IN_FEATS, C1_PAD), lambda i: (0, 0)),   # weights/biases:
            pl.BlockSpec((1, C1_PAD), lambda i: (0, 0)),          #   resident across
            pl.BlockSpec((C1_PAD, C2_PAD), lambda i: (0, 0)),     #   all grid steps
            pl.BlockSpec((1, C2_PAD), lambda i: (0, 0)),
            pl.BlockSpec((C2_PAD, C3_PAD), lambda i: (0, 0)),
            pl.BlockSpec((1, C3_PAD), lambda i: (0, 0)),
        ],
        out_specs=pl.BlockSpec((tile_b, C3_PAD), lambda i: (i, 0)),
        compiler_params=pltpu.CompilerParams(
            dimension_semantics=("parallel",)),
        cost_estimate=cost,
    )(x_flat, w1, b1, w2, b2, w3, b3)

    weights = out[:, :NUM_VIEWS].astype(jnp.float32)
    coord = out[:, NUM_VIEWS].astype(jnp.float32)
    return weights, coord


# ------------------------- parameter construction ---------------------------
def init_torch_params(key):
    """Deterministic synthetic parameters with the nn.Module's shapes."""
    ks = jax.random.split(key, 6)
    wc1 = 0.1 * jax.random.normal(ks[0], (10, 1, 3, 3), jnp.float32)   # Conv2d(1,10,3,p=1)
    bc1 = 0.1 * jax.random.normal(ks[1], (10,), jnp.float32)
    wc2 = 0.1 * jax.random.normal(ks[2], (10, 10, 3, 3), jnp.float32)  # Conv2d(10,10,3)
    bc2 = 0.1 * jax.random.normal(ks[3], (10,), jnp.float32)
    wc3 = 0.1 * jax.random.normal(ks[4], (1, 10, 5), jnp.float32)      # Conv1d(10,1,5,p=2)
    bc3 = 0.1 * jax.random.normal(ks[5], (1,), jnp.float32)
    return wc1, bc1, wc2, bc2, wc3, bc3


def build_dense_params(torch_params):
    """Lower the convs to exact dense (Toeplitz) matrices, zero-padded to lane
    multiples (padded rows/cols are zero so results stay exact)."""
    wc1, bc1, wc2, bc2, wc3, bc3 = [np.asarray(p, np.float32) for p in torch_params]

    # conv1: Conv2d(1,10,3,padding=1): (1,3,15) -> (10,3,15); in idx r*15+c,
    # out idx ch*45 + r*15 + c.
    w1 = np.zeros((IN_FEATS, C1_PAD), np.float32)
    b1 = np.zeros((1, C1_PAD), np.float32)
    for ch in range(10):
        for r in range(3):
            for c in range(15):
                o = ch * 45 + r * 15 + c
                b1[0, o] = bc1[ch]
                for kr in range(3):
                    for kc in range(3):
                        ir, ic = r + kr - 1, c + kc - 1
                        if 0 <= ir < 3 and 0 <= ic < 15:
                            w1[ir * 15 + ic, o] += wc1[ch, 0, kr, kc]

    # conv2: Conv2d(10,10,3,padding=0): (10,3,15) -> (10,1,13); out idx co*13 + t.
    w2 = np.zeros((C1_PAD, C2_PAD), np.float32)
    b2 = np.zeros((1, C2_PAD), np.float32)
    for co in range(10):
        for t in range(13):
            o = co * 13 + t
            b2[0, o] = bc2[co]
            for ci in range(10):
                for kr in range(3):
                    for kc in range(3):
                        w2[ci * 45 + kr * 15 + (t + kc), o] += wc2[co, ci, kr, kc]

    # conv3: Conv1d(10,1,5,padding=2): (10,13) -> (1,13); out idx t.
    w3 = np.zeros((C2_PAD, C3_PAD), np.float32)
    b3 = np.zeros((1, C3_PAD), np.float32)
    for t in range(13):
        b3[0, t] = bc3[0]
        for ci in range(10):
            for k in range(5):
                it = t + k - 2
                if 0 <= it < 13:
                    w3[ci * 13 + it, t] += wc3[0, ci, k]

    w1, w2, w3 = (jnp.asarray(w, jnp.bfloat16) for w in (w1, w2, w3))
    b1, b2, b3 = (jnp.asarray(b, jnp.float32) for b in (b1, b2, b3))
    return w1, b1, w2, b2, w3, b3


# ----------------------------- pure-JAX reference ---------------------------
def reference_forward(x, torch_params):
    wc1, bc1, wc2, bc2, wc3, bc3 = torch_params
    h = x.reshape(-1, 1, 3, 15).astype(jnp.float32)
    h = lax.conv_general_dilated(h, wc1, (1, 1), ((1, 1), (1, 1)),
                                 dimension_numbers=("NCHW", "OIHW", "NCHW"))
    h = jax.nn.relu(h + bc1[None, :, None, None])          # (B,10,3,15)
    h = lax.conv_general_dilated(h, wc2, (1, 1), "VALID",
                                 dimension_numbers=("NCHW", "OIHW", "NCHW"))
    h = jax.nn.relu(h + bc2[None, :, None, None])          # (B,10,1,13)
    h = h.reshape(-1, 10, 13)
    h = lax.conv_general_dilated(h[:, :, None, :], wc3[:, :, None, :], (1, 1),
                                 ((0, 0), (2, 2)),
                                 dimension_numbers=("NCHW", "OIHW", "NCHW"))
    h = jax.nn.relu(h + bc3[None, :, None, None])          # (B,1,1,13)
    logits = h.reshape(-1, NUM_VIEWS)
    w = jax.nn.softmax(logits, axis=1)
    positions = jnp.arange(NUM_VIEWS, dtype=jnp.float32)
    coord = w @ positions
    return w, coord


# ----------------------------------- main ------------------------------------
if __name__ == "__main__":
    key = jax.random.PRNGKey(0)
    k_param, k_small, k_big = jax.random.split(key, 3)

    torch_params = init_torch_params(k_param)
    dense_params = build_dense_params(torch_params)

    # small demo batch: 8 inputs of shape (3, 15)
    x_small = jax.random.normal(k_small, (8, 3, 15), jnp.float32)
    w_small, c_small = triple_mnist_forward(x_small, dense_params)
    jax.block_until_ready(c_small)

    w_ref, c_ref = reference_forward(x_small, torch_params)
    assert w_small.shape == (8, NUM_VIEWS) and c_small.shape == (8,)
    np.testing.assert_allclose(np.asarray(w_small), np.asarray(w_ref),
                               atol=2e-2, rtol=2e-2)
    np.testing.assert_allclose(np.asarray(c_small), np.asarray(c_ref),
                               atol=2.5e-1, rtol=0)

    # larger batch to exercise the batch grid (partial last block, no row padding)
    x_big = jax.random.normal(k_big, (2500, 3, 15), jnp.float32)
    w_big, c_big = triple_mnist_forward(x_big, dense_params)
    jax.block_until_ready(c_big)
    wb_ref, cb_ref = reference_forward(x_big, torch_params)
    np.testing.assert_allclose(np.asarray(w_big), np.asarray(wb_ref),
                               atol=2e-2, rtol=2e-2)
    np.testing.assert_allclose(np.asarray(c_big), np.asarray(cb_ref),
                               atol=2.5e-1, rtol=0)

    print("KERNEL_OK")
</pallas_src>

<mosaic_0001>
module attributes {stable_mosaic.version = 11 : i64} {
  func.func @triple_mnist_kernel(%arg0: i32, %arg1: memref<8x45xf32, #tpu.memory_space<vmem>>, %arg2: memref<45x512xbf16, #tpu.memory_space<vmem>>, %arg3: memref<1x512xf32, #tpu.memory_space<vmem>>, %arg4: memref<512x256xbf16, #tpu.memory_space<vmem>>, %arg5: memref<1x256xf32, #tpu.memory_space<vmem>>, %arg6: memref<256x128xbf16, #tpu.memory_space<vmem>>, %arg7: memref<1x128xf32, #tpu.memory_space<vmem>>, %arg8: memref<8x128xbf16, #tpu.memory_space<vmem>>) attributes {dimension_semantics = [#tpu.dimension_semantics<parallel>], iteration_bounds = array<i64: 1>, scalar_prefetch = 0 : i64, scratch_operands = 0 : i64, tpu.core_type = #tpu.core_type<tc>, window_params = [{transform_indices = @transform_0, window_bounds = array<i64: 8, 45>}, {pipeline_mode = #tpu.pipeline_mode<synchronous>, transform_indices = @transform_1, window_bounds = array<i64: 45, 512>}, {pipeline_mode = #tpu.pipeline_mode<synchronous>, transform_indices = @transform_2, window_bounds = array<i64: 1, 512>}, {pipeline_mode = #tpu.pipeline_mode<synchronous>, transform_indices = @transform_3, window_bounds = array<i64: 512, 256>}, {pipeline_mode = #tpu.pipeline_mode<synchronous>, transform_indices = @transform_4, window_bounds = array<i64: 1, 256>}, {pipeline_mode = #tpu.pipeline_mode<synchronous>, transform_indices = @transform_5, window_bounds = array<i64: 256, 128>}, {pipeline_mode = #tpu.pipeline_mode<synchronous>, transform_indices = @transform_6, window_bounds = array<i64: 1, 128>}, {transform_indices = @transform_7, window_bounds = array<i64: 8, 128>}]} {
    %c0 = arith.constant 0 : index
    %c0_0 = arith.constant 0 : index
    %0 = vector.load %arg1[%c0, %c0_0] : memref<8x45xf32, #tpu.memory_space<vmem>>, vector<8x45xf32>
    %1 = arith.truncf %0 : vector<8x45xf32> to vector<8x45xbf16>
    %c0_1 = arith.constant 0 : index
    %c0_2 = arith.constant 0 : index
    %2 = vector.load %arg2[%c0_1, %c0_2] : memref<45x512xbf16, #tpu.memory_space<vmem>>, vector<45x512xbf16>
    %cst = arith.constant dense<0.000000e+00> : vector<8x512xf32>
    %3 = tpu.matmul %1, %2, %cst {dimension_numbers = #tpu.dot_dimension_numbers<[1], [0], [0], [1], [0, 0, 1, 1], [], []>} : vector<8x45xbf16>, vector<45x512xbf16>, vector<8x512xf32> -> vector<8x512xf32>
    %c0_3 = arith.constant 0 : index
    %c0_4 = arith.constant 0 : index
    %4 = vector.load %arg3[%c0_3, %c0_4] : memref<1x512xf32, #tpu.memory_space<vmem>>, vector<1x512xf32>
    %5 = vector.broadcast %4 : vector<1x512xf32> to vector<8x512xf32>
    %6 = arith.addf %3, %5 : vector<8x512xf32>
    %cst_5 = arith.constant 0.000000e+00 : f32
    %7 = vector.broadcast %cst_5 : f32 to vector<8x512xf32>
    %8 = arith.maximumf %6, %7 : vector<8x512xf32>
    %9 = arith.truncf %8 : vector<8x512xf32> to vector<8x512xbf16>
    %c0_6 = arith.constant 0 : index
    %c0_7 = arith.constant 0 : index
    %10 = vector.load %arg4[%c0_6, %c0_7] : memref<512x256xbf16, #tpu.memory_space<vmem>>, vector<512x256xbf16>
    %cst_8 = arith.constant dense<0.000000e+00> : vector<8x256xf32>
    %11 = tpu.matmul %9, %10, %cst_8 {dimension_numbers = #tpu.dot_dimension_numbers<[1], [0], [0], [1], [0, 0, 1, 1], [], []>} : vector<8x512xbf16>, vector<512x256xbf16>, vector<8x256xf32> -> vector<8x256xf32>
    %c0_9 = arith.constant 0 : index
    %c0_10 = arith.constant 0 : index
    %12 = vector.load %arg5[%c0_9, %c0_10] : memref<1x256xf32, #tpu.memory_space<vmem>>, vector<1x256xf32>
    %13 = vector.broadcast %12 : vector<1x256xf32> to vector<8x256xf32>
    %14 = arith.addf %11, %13 : vector<8x256xf32>
    %cst_11 = arith.constant 0.000000e+00 : f32
    %15 = vector.broadcast %cst_11 : f32 to vector<8x256xf32>
    %16 = arith.maximumf %14, %15 : vector<8x256xf32>
    %17 = arith.truncf %16 : vector<8x256xf32> to vector<8x256xbf16>
    %c0_12 = arith.constant 0 : index
    %c0_13 = arith.constant 0 : index
    %18 = vector.load %arg6[%c0_12, %c0_13] : memref<256x128xbf16, #tpu.memory_space<vmem>>, vector<256x128xbf16>
    %cst_14 = arith.constant dense<0.000000e+00> : vector<8x128xf32>
    %19 = tpu.matmul %17, %18, %cst_14 {dimension_numbers = #tpu.dot_dimension_numbers<[1], [0], [0], [1], [0, 0, 1, 1], [], []>} : vector<8x256xbf16>, vector<256x128xbf16>, vector<8x128xf32> -> vector<8x128xf32>
    %c0_15 = arith.constant 0 : index
    %c0_16 = arith.constant 0 : index
    %20 = vector.load %arg7[%c0_15, %c0_16] : memref<1x128xf32, #tpu.memory_space<vmem>>, vector<1x128xf32>
    %21 = vector.broadcast %20 : vector<1x128xf32> to vector<8x128xf32>
    %22 = arith.addf %19, %21 : vector<8x128xf32>
    %cst_17 = arith.constant 0.000000e+00 : f32
    %23 = vector.broadcast %cst_17 : f32 to vector<8x128xf32>
    %24 = arith.maximumf %22, %23 : vector<8x128xf32>
    %25 = tpu.iota {dimensions = array<i32: 1>} : vector<8x128xi32>
    %cst_18 = arith.constant dense<0xFF800000> : vector<8xf32>
    %26 = vector.multi_reduction <maximumf>, %24, %cst_18 [1] : vector<8x128xf32> to vector<8xf32>
    %27 = vector.shape_cast %26 : vector<8xf32> to vector<8x1xf32>
    %c13_i32 = arith.constant 13 : i32
    %28 = vector.broadcast %c13_i32 : i32 to vector<8x128xi32>
    %29 = arith.cmpi slt, %25, %28 : vector<8x128xi32>
    %30 = vector.broadcast %27 : vector<8x1xf32> to vector<8x128xf32>
    %31 = arith.subf %24, %30 : vector<8x128xf32>
    %32 = math.exp %31 : vector<8x128xf32>
    %cst_19 = arith.constant 0.000000e+00 : f32
    %33 = vector.broadcast %cst_19 : f32 to vector<8x128xf32>
    %34 = arith.select %29, %32, %33 : vector<8x128xi1>, vector<8x128xf32>
    %cst_20 = arith.constant dense<0.000000e+00> : vector<8xf32>
    %35 = vector.multi_reduction <add>, %34, %cst_20 [1] : vector<8x128xf32> to vector<8xf32>
    %36 = vector.shape_cast %35 : vector<8xf32> to vector<8x1xf32>
    %37 = tpu.reciprocal %36 {approx = true} : vector<8x1xf32> -> vector<8x1xf32>
    %38 = vector.broadcast %37 : vector<8x1xf32> to vector<8x128xf32>
    %39 = arith.mulf %34, %38 : vector<8x128xf32>
    %40 = arith.sitofp %25 : vector<8x128xi32> to vector<8x128xf32>
    %41 = arith.mulf %39, %40 : vector<8x128xf32>
    %cst_21 = arith.constant dense<0.000000e+00> : vector<8xf32>
    %42 = vector.multi_reduction <add>, %41, %cst_21 [1] : vector<8x128xf32> to vector<8xf32>
    %43 = vector.shape_cast %42 : vector<8xf32> to vector<8x1xf32>
    %c13_i32_22 = arith.constant 13 : i32
    %44 = vector.broadcast %c13_i32_22 : i32 to vector<8x128xi32>
    %45 = arith.cmpi eq, %25, %44 : vector<8x128xi32>
    %46 = vector.shape_cast %43 : vector<8x1xf32> to vector<8x1xf32>
    %47 = vector.broadcast %46 : vector<8x1xf32> to vector<8x128xf32>
    %48 = arith.select %45, %47, %39 : vector<8x128xi1>, vector<8x128xf32>
    %49 = arith.truncf %48 : vector<8x128xf32> to vector<8x128xbf16>
    %c0_23 = arith.constant 0 : index
    %c0_24 = arith.constant 0 : index
    %50 = vector.load %arg8[%c0_23, %c0_24] : memref<8x128xbf16, #tpu.memory_space<vmem>>, vector<8x128xbf16>
    tpu.vector_store %arg8[%c0_23, %c0_24], %49 {strides = array<i32>} : memref<8x128xbf16, #tpu.memory_space<vmem>>, vector<8x128xbf16>,
    return
  }
  func.func @transform_0(%arg0: i32) -> (i32, i32) {
    %c0_i32 = arith.constant 0 : i32
    %c0_i32_0 = arith.constant 0 : i32
    return %arg0, %c0_i32 : i32, i32
  }
  func.func @transform_1(%arg0: i32) -> (i32, i32) {
    %c0_i32 = arith.constant 0 : i32
    %c0_i32_0 = arith.constant 0 : i32
    %c0_i32_1 = arith.constant 0 : i32
    return %c0_i32, %c0_i32_0 : i32, i32
  }
  func.func @transform_2(%arg0: i32) -> (i32, i32) {
    %c0_i32 = arith.constant 0 : i32
    %c0_i32_0 = arith.constant 0 : i32
    %c0_i32_1 = arith.constant 0 : i32
    return %c0_i32, %c0_i32_0 : i32, i32
  }
  func.func @transform_3(%arg0: i32) -> (i32, i32) {
    %c0_i32 = arith.constant 0 : i32
    %c0_i32_0 = arith.constant 0 : i32
    %c0_i32_1 = arith.constant 0 : i32
    return %c0_i32, %c0_i32_0 : i32, i32
  }
  func.func @transform_4(%arg0: i32) -> (i32, i32) {
    %c0_i32 = arith.constant 0 : i32
    %c0_i32_0 = arith.constant 0 : i32
    %c0_i32_1 = arith.constant 0 : i32
    return %c0_i32, %c0_i32_0 : i32, i32
  }
  func.func @transform_5(%arg0: i32) -> (i32, i32) {
    %c0_i32 = arith.constant 0 : i32
    %c0_i32_0 = arith.constant 0 : i32
    %c0_i32_1 = arith.constant 0 : i32
    return %c0_i32, %c0_i32_0 : i32, i32
  }
  func.func @transform_6(%arg0: i32) -> (i32, i32) {
    %c0_i32 = arith.constant 0 : i32
    %c0_i32_0 = arith.constant 0 : i32
    %c0_i32_1 = arith.constant 0 : i32
    return %c0_i32, %c0_i32_0 : i32, i32
  }
  func.func @transform_7(%arg0: i32) -> (i32, i32) {
    %c0_i32 = arith.constant 0 : i32
    %c0_i32_0 = arith.constant 0 : i32
    return %arg0, %c0_i32 : i32, i32
  }
}

</mosaic_0001>

<llo_original>
// kernel: tpu_custom_call.1
$region0: #{tpu_custom_call.1}
  #allocation0 [shape = 'u32[]', space=smem, size = 0x4, offset = 0x4, fixed_abs, tag = 'smem constant byte address 0x4 - core index']
  #allocation1 [shape = 'u32[72,128]{1,0:T(1,128)}', space=vmem, size = 0x9000, scoped, tag = 'internal scratch']
  %s0 = inlined_call_operand.hbm [shape: f32[8,45], index: 0, kind: input, shape index: {}]
  %s1 = inlined_call_operand.hbm [shape: bf16[45,512], index: 1, kind: input, shape index: {}]
  %s2 = inlined_call_operand.hbm [shape: f32[1,512], index: 2, kind: input, shape index: {}]
  %s3 = inlined_call_operand.hbm [shape: bf16[512,256], index: 3, kind: input, shape index: {}]
  %s4 = inlined_call_operand.vmem [shape: f32[1,256], index: 4, kind: input, shape index: {}]
  %s5 = inlined_call_operand.hbm [shape: bf16[256,128], index: 5, kind: input, shape index: {}]
  %s6 = inlined_call_operand.vmem [shape: f32[1,128], index: 6, kind: input, shape index: {}]
  %s7 = inlined_call_operand.hbm [shape: bf16[8,128], index: 7, kind: output, shape index: {}]
  %s8 = sld [smem:[#allocation0]]
  $region58: #{tpu_custom_call.1} parent=0
    _
  %s10 = ssub.s32 1, %s8
  %s11 = scalar_select 0, %s10, %s8
  $region1: #{tpu_custom_call.1} parent=0
    #allocation2 [shape = 'u8[4096]{0}', space=vmem, size = 0x1000, scoped, tag = 'input window, operand 0, single buffered']
    #allocation3 [shape = 's32[1]{0}', space=sflag, size = 0x4, scoped, tag = 'scoped memory for tpu_custom_call.1']
    #allocation4 [shape = 's32[1]{0}', space=sflag, size = 0x4, scoped, tag = 'scoped memory for tpu_custom_call.1']
    #allocation5 [shape = 'u8[49152]{0}', space=vmem, size = 0xc000, scoped, tag = 'input window, operand 1, single buffered']
    #allocation6 [shape = 's32[1]{0}', space=sflag, size = 0x4, scoped, tag = 'scoped memory for tpu_custom_call.1']
    #allocation7 [shape = 'u8[2048]{0}', space=vmem, size = 0x800, scoped, tag = 'input window, operand 2, single buffered']
    #allocation8 [shape = 'u8[262144]{0}', space=vmem, size = 0x40000, scoped, tag = 'input window, operand 3, single buffered']
    #allocation9 [shape = 's32[1]{0}', space=sflag, size = 0x4, scoped, tag = 'scoped memory for tpu_custom_call.1']
    #allocation10 [shape = 'u8[65536]{0}', space=vmem, size = 0x10000, scoped, tag = 'input window, operand 5, single buffered']
    #allocation11 [shape = 'u8[2048]{0}', space=vmem, size = 0x800, scoped, tag = 'output window, operand 0, single buffered']
    %12 = vsyncpa [#allocation3], 0
    %13 = vsyncpa [#allocation6], 0
    %14 = vsyncpa [#allocation9], 0
    %15 = vsyncpa [#allocation4], 0
    // Predicated region
    $region2: #{tpu_custom_call.1} parent=1 // pred_check
      _
    $region3: #{tpu_custom_call.1} parent=1 // pred_check_branch
      %17 = sbr.rel (0) target = $region5
    $region4: #{tpu_custom_call.1} parent=1 // pred_region
      %19 = vsyncadd [#allocation3], 0
      %s21 = sshll.u32 %s0, 4
      %s22 = int_to_ptr.hbm [resolvable:$true] %s21
      %s23 = sshll.u32 [#allocation2], 4
      %s24 = int_to_ptr.vmem [resolvable:$true] %s23
      %26 = dma.hbm_to_vmem [thread:$0]  %s22, 128, %s24, [#allocation3]
    $region5: #{tpu_custom_call.1} parent=1 // pred_fallthru
      _
    // Predicated region
    $region6: #{tpu_custom_call.1} parent=1 // pred_check
      _
    $region7: #{tpu_custom_call.1} parent=1 // pred_check_branch
      %28 = sbr.rel (0) target = $region9
    $region8: #{tpu_custom_call.1} parent=1 // pred_region
      %30 = vsyncadd [#allocation6], 0
      %s31 = sshll.u32 %s1, 4
      %s32 = int_to_ptr.hbm [resolvable:$true] %s31
      %s33 = sshll.u32 [#allocation5], 4
      %s34 = int_to_ptr.vmem [resolvable:$true] %s33
      %39 = dma.hbm_to_vmem [thread:$0]  %s32, 1536, %s34, [#allocation6], 256, 256, 16
    $region9: #{tpu_custom_call.1} parent=1 // pred_fallthru
      _
    // Predicated region
    $region10: #{tpu_custom_call.1} parent=1 // pred_check
      _
    $region11: #{tpu_custom_call.1} parent=1 // pred_check_branch
      %41 = sbr.rel (0) target = $region13
    $region12: #{tpu_custom_call.1} parent=1 // pred_region
      %43 = vsyncadd [#allocation6], 0
      %s45 = sshll.u32 %s2, 4
      %s46 = int_to_ptr.hbm [resolvable:$true] %s45
      %s47 = sshll.u32 [#allocation7], 4
      %s48 = int_to_ptr.vmem [resolvable:$true] %s47
      %50 = dma.hbm_to_vmem [thread:$0]  %s46, 64, %s48, [#allocation6]
    $region13: #{tpu_custom_call.1} parent=1 // pred_fallthru
      _
    // Predicated region
    $region14: #{tpu_custom_call.1} parent=1 // pred_check
      _
    $region15: #{tpu_custom_call.1} parent=1 // pred_check_branch
      %52 = sbr.rel (0) target = $region17
    $region16: #{tpu_custom_call.1} parent=1 // pred_region
      %54 = vsyncadd [#allocation9], 0
      %s55 = sshll.u32 %s3, 4
      %s56 = int_to_ptr.hbm [resolvable:$true] %s55
      %s57 = sshll.u32 [#allocation8], 4
      %s58 = int_to_ptr.vmem [resolvable:$true] %s57
      %63 = dma.hbm_to_vmem [thread:$0]  %s56, 8192, %s58, [#allocation9], 128, 128, 8
    $region17: #{tpu_custom_call.1} parent=1 // pred_fallthru
      _
    // Predicated region
    $region18: #{tpu_custom_call.1} parent=1 // pred_check
      _
    $region19: #{tpu_custom_call.1} parent=1 // pred_check_branch
      %65 = sbr.rel (0) target = $region21
    $region20: #{tpu_custom_call.1} parent=1 // pred_region
      _
    $region21: #{tpu_custom_call.1} parent=1 // pred_fallthru
      _
    // Predicated region
    $region22: #{tpu_custom_call.1} parent=1 // pred_check
      _
    $region23: #{tpu_custom_call.1} parent=1 // pred_check_branch
      %67 = sbr.rel (0) target = $region25
    $region24: #{tpu_custom_call.1} parent=1 // pred_region
      %69 = vsyncadd [#allocation9], 0
      %s70 = sshll.u32 %s5, 4
      %s71 = int_to_ptr.hbm [resolvable:$true] %s70
      %s72 = sshll.u32 [#allocation10], 4
      %s73 = int_to_ptr.vmem [resolvable:$true] %s72
      %78 = dma.hbm_to_vmem [thread:$0]  %s71, 2048, %s73, [#allocation9], 64, 64, 4
    $region25: #{tpu_custom_call.1} parent=1 // pred_fallthru
      _
    // Predicated region
    $region26: #{tpu_custom_call.1} parent=1 // pred_check
      _
    $region27: #{tpu_custom_call.1} parent=1 // pred_check_branch
      %80 = sbr.rel (0) target = $region29
    $region28: #{tpu_custom_call.1} parent=1 // pred_region
      _
    $region29: #{tpu_custom_call.1} parent=1 // pred_fallthru
      _
    // Predicated region
    $region30: #{tpu_custom_call.1} parent=1 // pred_check
      _
    $region31: #{tpu_custom_call.1} parent=1 // pred_check_branch
      %82 = sbr.rel (0) target = $region33
    $region32: #{tpu_custom_call.1} parent=1 // pred_region
      %84 = dma.done [#allocation3], 128
    $region33: #{tpu_custom_call.1} parent=1 // pred_fallthru
      _
    // Predicated region
    $region34: #{tpu_custom_call.1} parent=1 // pred_check
      _
    $region35: #{tpu_custom_call.1} parent=1 // pred_check_branch
      %86 = sbr.rel (0) target = $region37
    $region36: #{tpu_custom_call.1} parent=1 // pred_region
      %88 = dma.done [#allocation6], 1536
    $region37: #{tpu_custom_call.1} parent=1 // pred_fallthru
      _
    // Predicated region
    $region38: #{tpu_custom_call.1} parent=1 // pred_check
      _
    $region39: #{tpu_custom_call.1} parent=1 // pred_check_branch
      %90 = sbr.rel (0) target = $region41
    $region40: #{tpu_custom_call.1} parent=1 // pred_region
      %92 = dma.done [#allocation6], 64
    $region41: #{tpu_custom_call.1} parent=1 // pred_fallthru
      _
    // Predicated region
    $region42: #{tpu_custom_call.1} parent=1 // pred_check
      _
    $region43: #{tpu_custom_call.1} parent=1 // pred_check_branch
      %94 = sbr.rel (0) target = $region45
    $region44: #{tpu_custom_call.1} parent=1 // pred_region
      %96 = dma.done [#allocation9], 8192
    $region45: #{tpu_custom_call.1} parent=1 // pred_fallthru
      _
    // Predicated region
    $region46: #{tpu_custom_call.1} parent=1 // pred_check
      _
    $region47: #{tpu_custom_call.1} parent=1 // pred_check_branch
      %98 = sbr.rel (0) target = $region49
    $region48: #{tpu_custom_call.1} parent=1 // pred_region
      %100 = dma.done [#allocation9], 2048
    $region49: #{tpu_custom_call.1} parent=1 // pred_fallthru
      _
    %v102 = vld [vmem:[#allocation2] sm:$0xff]
    %v103 = vpack.c.bf16 %v102, %v102
    %v104 = vld [vmem:[#allocation5] sm:$0xff]
    %v105 = vld [vmem:[#allocation5 + $0x8] sm:$0xff]
    %v106 = vld [vmem:[#allocation5 + $0x10] sm:$0xff]
    %v107 = vld [vmem:[#allocation5 + $0x18] sm:$0xff]
    %v108 = vld [vmem:[#allocation5 + $0x20] sm:$0xff]
    %v109 = vld [vmem:[#allocation5 + $0x28] sm:$0xff]
    %v110 = vld [vmem:[#allocation5 + $0x30] sm:$0xff]
    %v111 = vld [vmem:[#allocation5 + $0x38] sm:$0xff]
    %v112 = vld [vmem:[#allocation5 + $0x40] sm:$0xff]
    %v113 = vld [vmem:[#allocation5 + $0x48] sm:$0xff]
    %v114 = vld [vmem:[#allocation5 + $0x50] sm:$0x77]
    %v115 = vld [vmem:[#allocation5 + $0x58] sm:$0x77]
    %v116 = vld [vmem:[#allocation7] sm:$0xf]
    %v118 = vperm.slane %v116, 0
    %v119 = vperm.slane %v116, 1
    %v120 = vperm.slane %v116, 2
    %v121 = vperm.slane %v116, 3
    %v138 = vunpack.c.l.b16 %v104
    %v139 = vunpack.c.h.b16 %v104
    %v140 = vunpack.c.l.b16 %v105
    %v141 = vunpack.c.h.b16 %v105
    %v142 = vunpack.c.l.b16 %v106
    %v143 = vunpack.c.h.b16 %v106
    %v144 = vunpack.c.l.b16 %v107
    %v145 = vunpack.c.h.b16 %v107
    %v146 = vunpack.c.l.b16 %v108
    %v147 = vunpack.c.h.b16 %v108
    %v148 = vunpack.c.l.b16 %v109
    %v149 = vunpack.c.h.b16 %v109
    %v150 = vunpack.c.l.b16 %v110
    %v151 = vunpack.c.h.b16 %v110
    %v152 = vunpack.c.l.b16 %v111
    %v153 = vunpack.c.h.b16 %v111
    %v154 = vunpack.c.l.b16 %v112
    %v155 = vunpack.c.h.b16 %v112
    %v156 = vunpack.c.l.b16 %v113
    %v157 = vunpack.c.h.b16 %v113
    %v158 = vunpack.c.l.b16 %v114
    %v159 = vunpack.c.h.b16 %v114
    %v160 = vunpack.c.l.b16 %v115
    %v161 = vunpack.c.h.b16 %v115
    %v162 = vpack.c.b16 %v142, %v138
    %v163 = vpack.c.b16 %v143, %v139
    %v164 = vpack.c.b16 %v144, %v140
    %v165 = vpack.c.b16 %v145, %v141
    %v166 = vpack.c.b16 %v150, %v146
    %v167 = vpack.c.b16 %v151, %v147
    %v168 = vpack.c.b16 %v152, %v148
    %v169 = vpack.c.b16 %v153, %v149
    %v170 = vpack.c.b16 %v158, %v154
    %v171 = vpack.c.b16 %v159, %v155
    %v172 = vpack.c.b16 %v160, %v156
    %v173 = vpack.c.b16 %v161, %v157
    %vm182 = vcmask 367616
    %v184 = vsel %vm182, %v103, 0
    %vm186 = vcmask 1045504
    %vm187 = vcmask 1046528
    %v188 = vsel %vm186, 4294967295, 65535
    %v189 = vsel %vm187, %v188, 0
    %v191 = vand.u32 %v170, %v189
    %v194 = vand.u32 %v171, %v189
    %v197 = vand.u32 %v172, %v189
    %v200 = vand.u32 %v173, %v189
    %202 = vmatpush.bf16.msra.mxu0 0
    %203 = vmatpush.bf16.msra.mxu0 0
    %204 = vmatpush.bf16.msra.mxu0 0
    %205 = vmatpush.bf16.msra.mxu0 0
    %206 = vmatpush.bf16.msra.mxu0 0
    %207 = vmatpush.bf16.msra.mxu0 %v191
    %208 = vmatpush.bf16.msra.mxu0 %v166
    %209 = vmatpush.bf16.msra.mxu0 %v162
    %210 = vmatmul.bf16.gmra.mxu0 %v184
    %v211 = vpop.f32.mrf.mxu0
    %v212 = vadd.f32 %v118, %v211
    %v213 = vpop.f32.mrf.mxu0
    %214 = vdwg.mxu0
    %215 = vmatpush.bf16.msra.mxu0 0
    %216 = vmatpush.bf16.msra.mxu0 0
    %217 = vmatpush.bf16.msra.mxu0 0
    %218 = vmatpush.bf16.msra.mxu0 0
    %219 = vmatpush.bf16.msra.mxu0 0
    %220 = vmatpush.bf16.msra.mxu0 %v194
    %221 = vmatpush.bf16.msra.mxu0 %v167
    %222 = vmatpush.bf16.msra.mxu0 %v163
    %223 = vmatmul.bf16.gmra.mxu0 %v184
    %v224 = vpop.f32.mrf.mxu0
    %v225 = vadd.f32 %v119, %v224
    %v226 = vpop.f32.mrf.mxu0
    %227 = vdwg.mxu0
    %228 = vmatpush.bf16.msra.mxu0 0
    %229 = vmatpush.bf16.msra.mxu0 0
    %230 = vmatpush.bf16.msra.mxu0 0
    %231 = vmatpush.bf16.msra.mxu0 0
    %232 = vmatpush.bf16.msra.mxu0 0
    %233 = vmatpush.bf16.msra.mxu0 %v197
    %234 = vmatpush.bf16.msra.mxu0 %v168
    %235 = vmatpush.bf16.msra.mxu0 %v164
    %236 = vmatmul.bf16.gmra.mxu0 %v184
    %v237 = vpop.f32.mrf.mxu0
    %v238 = vadd.f32 %v120, %v237
    %v239 = vpop.f32.mrf.mxu0
    %240 = vdwg.mxu0
    %241 = vmatpush.bf16.msra.mxu0 0
    %242 = vmatpush.bf16.msra.mxu0 0
    %243 = vmatpush.bf16.msra.mxu0 0
    %244 = vmatpush.bf16.msra.mxu0 0
    %245 = vmatpush.bf16.msra.mxu0 0
    %246 = vmatpush.bf16.msra.mxu0 %v200
    %247 = vmatpush.bf16.msra.mxu0 %v169
    %248 = vmatpush.bf16.msra.mxu0 %v165
    %249 = vmatmul.bf16.gmra.mxu0 %v184
    %v250 = vpop.f32.mrf.mxu0
    %v251 = vadd.f32 %v121, %v250
    %v252 = vpop.f32.mrf.mxu0
    %253 = vdwg.mxu0
    %v254 = vmax.f32 %v212, 0.0
    %v255 = vmax.f32 %v225, 0.0
    %v256 = vmax.f32 %v238, 0.0
    %v257 = vmax.f32 %v251, 0.0
    %v258 = vpack.c.bf16 %v254, %v254
    %v259 = vpack.c.bf16 %v255, %v255
    %v260 = vpack.c.bf16 %v256, %v256
    %v261 = vpack.c.bf16 %v257, %v257
    %v262 = vld [vmem:[#allocation8] sm:$0xff]
    %v263 = vld [vmem:[#allocation8 + $0x8] sm:$0xff]
    %v264 = vld [vmem:[#allocation8 + $0x10] sm:$0xff]
    %v265 = vld [vmem:[#allocation8 + $0x18] sm:$0xff]
    %v266 = vld [vmem:[#allocation8 + $0x20] sm:$0xff]
    %v267 = vld [vmem:[#allocation8 + $0x28] sm:$0xff]
    %v268 = vld [vmem:[#allocation8 + $0x30] sm:$0xff]
    %v269 = vld [vmem:[#allocation8 + $0x38] sm:$0xff]
    %v270 = vld [vmem:[#allocation8 + $0x40] sm:$0xff]
    %v271 = vld [vmem:[#allocation8 + $0x48] sm:$0xff]
    %v272 = vld [vmem:[#allocation8 + $0x50] sm:$0xff]
    %v273 = vld [vmem:[#allocation8 + $0x58] sm:$0xff]
    %v274 = vld [vmem:[#allocation8 + $0x60] sm:$0xff]
    %v275 = vld [vmem:[#allocation8 + $0x68] sm:$0xff]
    %v276 = vld [vmem:[#allocation8 + $0x70] sm:$0xff]
    %v277 = vld [vmem:[#allocation8 + $0x78] sm:$0xff]
    %v278 = vld [vmem:[#allocation8 + $0x80] sm:$0xff]
    %v279 = vld [vmem:[#allocation8 + $0x88] sm:$0xff]
    %v280 = vld [vmem:[#allocation8 + $0x90] sm:$0xff]
    %v281 = vld [vmem:[#allocation8 + $0x98] sm:$0xff]
    %v282 = vld [vmem:[#allocation8 + $0xa0] sm:$0xff]
    %v283 = vld [vmem:[#allocation8 + $0xa8] sm:$0xff]
    %v284 = vld [vmem:[#allocation8 + $0xb0] sm:$0xff]
    %v285 = vld [vmem:[#allocation8 + $0xb8] sm:$0xff]
    %v286 = vld [vmem:[#allocation8 + $0xc0] sm:$0xff]
    %v287 = vld [vmem:[#allocation8 + $0xc8] sm:$0xff]
    %v288 = vld [vmem:[#allocation8 + $0xd0] sm:$0xff]
    %v289 = vld [vmem:[#allocation8 + $0xd8] sm:$0xff]
    %v290 = vld [vmem:[#allocation8 + $0xe0] sm:$0xff]
    %v291 = vld [vmem:[#allocation8 + $0xe8] sm:$0xff]
    %v292 = vld [vmem:[#allocation8 + $0xf0] sm:$0xff]
    %v293 = vld [vmem:[#allocation8 + $0xf8] sm:$0xff]
    %v294 = vld [vmem:[#allocation8 + $0x100] sm:$0xff]
    %v295 = vld [vmem:[#allocation8 + $0x108] sm:$0xff]
    %v296 = vld [vmem:[#allocation8 + $0x110] sm:$0xff]
    %v297 = vld [vmem:[#allocation8 + $0x118] sm:$0xff]
    %v298 = vld [vmem:[#allocation8 + $0x120] sm:$0xff]
    %v299 = vld [vmem:[#allocation8 + $0x128] sm:$0xff]
    %v300 = vld [vmem:[#allocation8 + $0x130] sm:$0xff]
    %v301 = vld [vmem:[#allocation8 + $0x138] sm:$0xff]
    %v302 = vld [vmem:[#allocation8 + $0x140] sm:$0xff]
    %v303 = vld [vmem:[#allocation8 + $0x148] sm:$0xff]
    %v304 = vld [vmem:[#allocation8 + $0x150] sm:$0xff]
    %v305 = vld [vmem:[#allocation8 + $0x158] sm:$0xff]
    %v306 = vld [vmem:[#allocation8 + $0x160] sm:$0xff]
    %v307 = vld [vmem:[#allocation8 + $0x168] sm:$0xff]
    %v308 = vld [vmem:[#allocation8 + $0x170] sm:$0xff]
    %v309 = vld [vmem:[#allocation8 + $0x178] sm:$0xff]
    %v310 = vld [vmem:[#allocation8 + $0x180] sm:$0xff]
    %v311 = vld [vmem:[#allocation8 + $0x188] sm:$0xff]
    %v312 = vld [vmem:[#allocation8 + $0x190] sm:$0xff]
    %v313 = vld [vmem:[#allocation8 + $0x198] sm:$0xff]
    %v314 = vld [vmem:[#allocation8 + $0x1a0] sm:$0xff]
    %v315 = vld [vmem:[#allocation8 + $0x1a8] sm:$0xff]
    %v316 = vld [vmem:[#allocation8 + $0x1b0] sm:$0xff]
    %v317 = vld [vmem:[#allocation8 + $0x1b8] sm:$0xff]
    %v318 = vld [vmem:[#allocation8 + $0x1c0] sm:$0xff]
    %v319 = vld [vmem:[#allocation8 + $0x1c8] sm:$0xff]
    %v320 = vld [vmem:[#allocation8 + $0x1d0] sm:$0xff]
    %v321 = vld [vmem:[#allocation8 + $0x1d8] sm:$0xff]
    %v322 = vld [vmem:[#allocation8 + $0x1e0] sm:$0xff]
    %v323 = vld [vmem:[#allocation8 + $0x1e8] sm:$0xff]
    %v324 = vld [vmem:[#allocation8 + $0x1f0] sm:$0xff]
    %v325 = vld [vmem:[#allocation8 + $0x1f8] sm:$0xff]
    %v326 = vld [vmem:[%s4] sm:$0x3]
    %v328 = vperm.slane %v326, 0
    %v329 = vperm.slane %v326, 1
    %v396 = vunpack.c.l.b16 %v262
    %v397 = vunpack.c.h.b16 %v262
    %v398 = vunpack.c.l.b16 %v263
    %v399 = vunpack.c.h.b16 %v263
    %v400 = vunpack.c.l.b16 %v264
    %v401 = vunpack.c.h.b16 %v264
    %v402 = vunpack.c.l.b16 %v265
    %v403 = vunpack.c.h.b16 %v265
    %v404 = vunpack.c.l.b16 %v266
    %v405 = vunpack.c.h.b16 %v266
    %v406 = vunpack.c.l.b16 %v267
    %v407 = vunpack.c.h.b16 %v267
    %v408 = vunpack.c.l.b16 %v268
    %v409 = vunpack.c.h.b16 %v268
    %v410 = vunpack.c.l.b16 %v269
    %v411 = vunpack.c.h.b16 %v269
    %v412 = vunpack.c.l.b16 %v270
    %v413 = vunpack.c.h.b16 %v270
    %v414 = vunpack.c.l.b16 %v271
    %v415 = vunpack.c.h.b16 %v271
    %v416 = vunpack.c.l.b16 %v272
    %v417 = vunpack.c.h.b16 %v272
    %v418 = vunpack.c.l.b16 %v273
    %v419 = vunpack.c.h.b16 %v273
    %v420 = vunpack.c.l.b16 %v274
    %v421 = vunpack.c.h.b16 %v274
    %v422 = vunpack.c.l.b16 %v275
    %v423 = vunpack.c.h.b16 %v275
    %v424 = vunpack.c.l.b16 %v276
    %v425 = vunpack.c.h.b16 %v276
    %v426 = vunpack.c.l.b16 %v277
    %v427 = vunpack.c.h.b16 %v277
    %v428 = vunpack.c.l.b16 %v278
    %v429 = vunpack.c.h.b16 %v278
    %v430 = vunpack.c.l.b16 %v279
    %v431 = vunpack.c.h.b16 %v279
    %v432 = vunpack.c.l.b16 %v280
    %v433 = vunpack.c.h.b16 %v280
    %v434 = vunpack.c.l.b16 %v281
    %v435 = vunpack.c.h.b16 %v281
    %v436 = vunpack.c.l.b16 %v282
    %v437 = vunpack.c.h.b16 %v282
    %v438 = vunpack.c.l.b16 %v283
    %v439 = vunpack.c.h.b16 %v283
    %v440 = vunpack.c.l.b16 %v284
    %v441 = vunpack.c.h.b16 %v284
    %v442 = vunpack.c.l.b16 %v285
    %v443 = vunpack.c.h.b16 %v285
    %v444 = vunpack.c.l.b16 %v286
    %v445 = vunpack.c.h.b16 %v286
    %v446 = vunpack.c.l.b16 %v287
    %v447 = vunpack.c.h.b16 %v287
    %v448 = vunpack.c.l.b16 %v288
    %v449 = vunpack.c.h.b16 %v288
    %v450 = vunpack.c.l.b16 %v289
    %v451 = vunpack.c.h.b16 %v289
    %v452 = vunpack.c.l.b16 %v290
    %v453 = vunpack.c.h.b16 %v290
    %v454 = vunpack.c.l.b16 %v291
    %v455 = vunpack.c.h.b16 %v291
    %v456 = vunpack.c.l.b16 %v292
    %v457 = vunpack.c.h.b16 %v292
    %v458 = vunpack.c.l.b16 %v293
    %v459 = vunpack.c.h.b16 %v293
    %v460 = vunpack.c.l.b16 %v294
    %v461 = vunpack.c.h.b16 %v294
    %v462 = vunpack.c.l.b16 %v295
    %v463 = vunpack.c.h.b16 %v295
    %v464 = vunpack.c.l.b16 %v296
    %v465 = vunpack.c.h.b16 %v296
    %v466 = vunpack.c.l.b16 %v297
    %v467 = vunpack.c.h.b16 %v297
    %v468 = vunpack.c.l.b16 %v298
    %v469 = vunpack.c.h.b16 %v298
    %v470 = vunpack.c.l.b16 %v299
    %v471 = vunpack.c.h.b16 %v299
    %v472 = vunpack.c.l.b16 %v300
    %v473 = vunpack.c.h.b16 %v300
    %v474 = vunpack.c.l.b16 %v301
    %v475 = vunpack.c.h.b16 %v301
    %v476 = vunpack.c.l.b16 %v302
    %v477 = vunpack.c.h.b16 %v302
    %v478 = vunpack.c.l.b16 %v303
    %v479 = vunpack.c.h.b16 %v303
    %v480 = vunpack.c.l.b16 %v304
    %v481 = vunpack.c.h.b16 %v304
    %v482 = vunpack.c.l.b16 %v305
    %v483 = vunpack.c.h.b16 %v305
    %v484 = vunpack.c.l.b16 %v306
    %v485 = vunpack.c.h.b16 %v306
    %v486 = vunpack.c.l.b16 %v307
    %v487 = vunpack.c.h.b16 %v307
    %v488 = vunpack.c.l.b16 %v308
    %v489 = vunpack.c.h.b16 %v308
    %v490 = vunpack.c.l.b16 %v309
    %v491 = vunpack.c.h.b16 %v309
    %v492 = vunpack.c.l.b16 %v310
    %v493 = vunpack.c.h.b16 %v310
    %v494 = vunpack.c.l.b16 %v311
    %v495 = vunpack.c.h.b16 %v311
    %v496 = vunpack.c.l.b16 %v312
    %v497 = vunpack.c.h.b16 %v312
    %v498 = vunpack.c.l.b16 %v313
    %v499 = vunpack.c.h.b16 %v313
    %v500 = vunpack.c.l.b16 %v314
    %v501 = vunpack.c.h.b16 %v314
    %v502 = vunpack.c.l.b16 %v315
    %v503 = vunpack.c.h.b16 %v315
    %v504 = vunpack.c.l.b16 %v316
    %v505 = vunpack.c.h.b16 %v316
    %v506 = vunpack.c.l.b16 %v317
    %v507 = vunpack.c.h.b16 %v317
    %v508 = vunpack.c.l.b16 %v318
    %v509 = vunpack.c.h.b16 %v318
    %v510 = vunpack.c.l.b16 %v319
    %v511 = vunpack.c.h.b16 %v319
    %v512 = vunpack.c.l.b16 %v320
    %v513 = vunpack.c.h.b16 %v320
    %v514 = vunpack.c.l.b16 %v321
    %v515 = vunpack.c.h.b16 %v321
    %v516 = vunpack.c.l.b16 %v322
    %v517 = vunpack.c.h.b16 %v322
    %v518 = vunpack.c.l.b16 %v323
    %v519 = vunpack.c.h.b16 %v323
    %v520 = vunpack.c.l.b16 %v324
    %v521 = vunpack.c.h.b16 %v324
    %v522 = vunpack.c.l.b16 %v325
    %v523 = vunpack.c.h.b16 %v325
    %v524 = vpack.c.b16 %v398, %v396
    %v525 = vpack.c.b16 %v399, %v397
    %v526 = vpack.c.b16 %v402, %v400
    %v527 = vpack.c.b16 %v403, %v401
    %v528 = vpack.c.b16 %v406, %v404
    %v529 = vpack.c.b16 %v407, %v405
    %v530 = vpack.c.b16 %v410, %v408
    %v531 = vpack.c.b16 %v411, %v409
    %v532 = vpack.c.b16 %v414, %v412
    %v533 = vpack.c.b16 %v415, %v413
    %v534 = vpack.c.b16 %v418, %v416
    %v535 = vpack.c.b16 %v419, %v417
    %v536 = vpack.c.b16 %v422, %v420
    %v537 = vpack.c.b16 %v423, %v421
    %v538 = vpack.c.b16 %v426, %v424
    %v539 = vpack.c.b16 %v427, %v425
    %v540 = vpack.c.b16 %v430, %v428
    %v541 = vpack.c.b16 %v431, %v429
    %v542 = vpack.c.b16 %v434, %v432
    %v543 = vpack.c.b16 %v435, %v433
    %v544 = vpack.c.b16 %v438, %v436
    %v545 = vpack.c.b16 %v439, %v437
    %v546 = vpack.c.b16 %v442, %v440
    %v547 = vpack.c.b16 %v443, %v441
    %v548 = vpack.c.b16 %v446, %v444
    %v549 = vpack.c.b16 %v447, %v445
    %v550 = vpack.c.b16 %v450, %v448
    %v551 = vpack.c.b16 %v451, %v449
    %v552 = vpack.c.b16 %v454, %v452
    %v553 = vpack.c.b16 %v455, %v453
    %v554 = vpack.c.b16 %v458, %v456
    %v555 = vpack.c.b16 %v459, %v457
    %v556 = vpack.c.b16 %v462, %v460
    %v557 = vpack.c.b16 %v463, %v461
    %v558 = vpack.c.b16 %v466, %v464
    %v559 = vpack.c.b16 %v467, %v465
    %v560 = vpack.c.b16 %v470, %v468
    %v561 = vpack.c.b16 %v471, %v469
    %v562 = vpack.c.b16 %v474, %v472
    %v563 = vpack.c.b16 %v475, %v473
    %v564 = vpack.c.b16 %v478, %v476
    %v565 = vpack.c.b16 %v479, %v477
    %v566 = vpack.c.b16 %v482, %v480
    %v567 = vpack.c.b16 %v483, %v481
    %v568 = vpack.c.b16 %v486, %v484
    %v569 = vpack.c.b16 %v487, %v485
    %v570 = vpack.c.b16 %v490, %v488
    %v571 = vpack.c.b16 %v491, %v489
    %v572 = vpack.c.b16 %v494, %v492
    %v573 = vpack.c.b16 %v495, %v493
    %v574 = vpack.c.b16 %v498, %v496
    %v575 = vpack.c.b16 %v499, %v497
    %v576 = vpack.c.b16 %v502, %v500
    %v577 = vpack.c.b16 %v503, %v501
    %v578 = vpack.c.b16 %v506, %v504
    %v579 = vpack.c.b16 %v507, %v505
    %v580 = vpack.c.b16 %v510, %v508
    %v581 = vpack.c.b16 %v511, %v509
    %v582 = vpack.c.b16 %v514, %v512
    %v583 = vpack.c.b16 %v515, %v513
    %v584 = vpack.c.b16 %v518, %v516
    %v585 = vpack.c.b16 %v519, %v517
    %v586 = vpack.c.b16 %v522, %v520
    %v587 = vpack.c.b16 %v523, %v521
    %652 = vmatpush.bf16.msra.mxu0 %v538
    %653 = vmatpush.bf16.msra.mxu0 %v536
    %654 = vmatpush.bf16.msra.mxu0 %v534
    %655 = vmatpush.bf16.msra.mxu0 %v532
    %656 = vmatpush.bf16.msra.mxu0 %v530
    %657 = vmatpush.bf16.msra.mxu0 %v528
    %658 = vmatpush.bf16.msra.mxu0 %v526
    %659 = vmatpush.bf16.msra.mxu0 %v524
    %660 = vmatmul.bf16.gmra.mxu0 %v258
    %v661 = vpop.f32.mrf.mxu0
    %v662 = vadd.f32 %v328, %v661
    %v663 = vpop.f32.mrf.mxu0
    %664 = vdwg.mxu0
    %665 = vmatpush.bf16.msra.mxu0 %v554
    %666 = vmatpush.bf16.msra.mxu0 %v552
    %667 = vmatpush.bf16.msra.mxu0 %v550
    %668 = vmatpush.bf16.msra.mxu0 %v548
    %669 = vmatpush.bf16.msra.mxu0 %v546
    %670 = vmatpush.bf16.msra.mxu0 %v544
    %671 = vmatpush.bf16.msra.mxu0 %v542
    %672 = vmatpush.bf16.msra.mxu0 %v540
    %673 = vmatmul.bf16.gmra.mxu0 %v259
    %v674 = vpop.f32.mrf.mxu0
    %v675 = vadd.f32 %v662, %v674
    %v676 = vpop.f32.mrf.mxu0
    %677 = vdwg.mxu0
    %678 = vmatpush.bf16.msra.mxu0 %v570
    %679 = vmatpush.bf16.msra.mxu0 %v568
    %680 = vmatpush.bf16.msra.mxu0 %v566
    %681 = vmatpush.bf16.msra.mxu0 %v564
    %682 = vmatpush.bf16.msra.mxu0 %v562
    %683 = vmatpush.bf16.msra.mxu0 %v560
    %684 = vmatpush.bf16.msra.mxu0 %v558
    %685 = vmatpush.bf16.msra.mxu0 %v556
    %686 = vmatmul.bf16.gmra.mxu0 %v260
    %v687 = vpop.f32.mrf.mxu0
    %v688 = vadd.f32 %v675, %v687
    %v689 = vpop.f32.mrf.mxu0
    %690 = vdwg.mxu0
    %691 = vmatpush.bf16.msra.mxu0 %v586
    %692 = vmatpush.bf16.msra.mxu0 %v584
    %693 = vmatpush.bf16.msra.mxu0 %v582
    %694 = vmatpush.bf16.msra.mxu0 %v580
    %695 = vmatpush.bf16.msra.mxu0 %v578
    %696 = vmatpush.bf16.msra.mxu0 %v576
    %697 = vmatpush.bf16.msra.mxu0 %v574
    %698 = vmatpush.bf16.msra.mxu0 %v572
    %699 = vmatmul.bf16.gmra.mxu0 %v261
    %v700 = vpop.f32.mrf.mxu0
    %v701 = vadd.f32 %v688, %v700
    %v702 = vpop.f32.mrf.mxu0
    %703 = vdwg.mxu0
    %704 = vmatpush.bf16.msra.mxu0 %v539
    %705 = vmatpush.bf16.msra.mxu0 %v537
    %706 = vmatpush.bf16.msra.mxu0 %v535
    %707 = vmatpush.bf16.msra.mxu0 %v533
    %708 = vmatpush.bf16.msra.mxu0 %v531
    %709 = vmatpush.bf16.msra.mxu0 %v529
    %710 = vmatpush.bf16.msra.mxu0 %v527
    %711 = vmatpush.bf16.msra.mxu0 %v525
    %712 = vmatmul.bf16.gmra.mxu0 %v258
    %v713 = vpop.f32.mrf.mxu0
    %v714 = vadd.f32 %v329, %v713
    %v715 = vpop.f32.mrf.mxu0
    %716 = vdwg.mxu0
    %717 = vmatpush.bf16.msra.mxu0 %v555
    %718 = vmatpush.bf16.msra.mxu0 %v553
    %719 = vmatpush.bf16.msra.mxu0 %v551
    %720 = vmatpush.bf16.msra.mxu0 %v549
    %721 = vmatpush.bf16.msra.mxu0 %v547
    %722 = vmatpush.bf16.msra.mxu0 %v545
    %723 = vmatpush.bf16.msra.mxu0 %v543
    %724 = vmatpush.bf16.msra.mxu0 %v541
    %725 = vmatmul.bf16.gmra.mxu0 %v259
    %v726 = vpop.f32.mrf.mxu0
    %v727 = vadd.f32 %v714, %v726
    %v728 = vpop.f32.mrf.mxu0
    %729 = vdwg.mxu0
    %730 = vmatpush.bf16.msra.mxu0 %v571
    %731 = vmatpush.bf16.msra.mxu0 %v569
    %732 = vmatpush.bf16.msra.mxu0 %v567
    %733 = vmatpush.bf16.msra.mxu0 %v565
    %734 = vmatpush.bf16.msra.mxu0 %v563
    %735 = vmatpush.bf16.msra.mxu0 %v561
    %736 = vmatpush.bf16.msra.mxu0 %v559
    %737 = vmatpush.bf16.msra.mxu0 %v557
    %738 = vmatmul.bf16.gmra.mxu0 %v260
    %v739 = vpop.f32.mrf.mxu0
    %v740 = vadd.f32 %v727, %v739
    %v741 = vpop.f32.mrf.mxu0
    %742 = vdwg.mxu0
    %743 = vmatpush.bf16.msra.mxu0 %v587
    %744 = vmatpush.bf16.msra.mxu0 %v585
    %745 = vmatpush.bf16.msra.mxu0 %v583
    %746 = vmatpush.bf16.msra.mxu0 %v581
    %747 = vmatpush.bf16.msra.mxu0 %v579
    %748 = vmatpush.bf16.msra.mxu0 %v577
    %749 = vmatpush.bf16.msra.mxu0 %v575
    %750 = vmatpush.bf16.msra.mxu0 %v573
    %751 = vmatmul.bf16.gmra.mxu0 %v261
    %v752 = vpop.f32.mrf.mxu0
    %v753 = vadd.f32 %v740, %v752
    %v754 = vpop.f32.mrf.mxu0
    %755 = vdwg.mxu0
    %v756 = vmax.f32 %v701, 0.0
    %v757 = vmax.f32 %v753, 0.0
    %v758 = vpack.c.bf16 %v756, %v756
    %v759 = vpack.c.bf16 %v757, %v757
    %v760 = vld [vmem:[#allocation10] sm:$0xf]
    %v761 = vld [vmem:[#allocation10 + $0x4] sm:$0xf]
    %v762 = vld [vmem:[#allocation10 + $0x8] sm:$0xf]
    %v763 = vld [vmem:[#allocation10 + $0xc] sm:$0xf]
    %v764 = vld [vmem:[#allocation10 + $0x10] sm:$0xf]
    %v765 = vld [vmem:[#allocation10 + $0x14] sm:$0xf]
    %v766 = vld [vmem:[#allocation10 + $0x18] sm:$0xf]
    %v767 = vld [vmem:[#allocation10 + $0x1c] sm:$0xf]
    %v768 = vld [vmem:[#allocation10 + $0x20] sm:$0xf]
    %v769 = vld [vmem:[#allocation10 + $0x24] sm:$0xf]
    %v770 = vld [vmem:[#allocation10 + $0x28] sm:$0xf]
    %v771 = vld [vmem:[#allocation10 + $0x2c] sm:$0xf]
    %v772 = vld [vmem:[#allocation10 + $0x30] sm:$0xf]
    %v773 = vld [vmem:[#allocation10 + $0x34] sm:$0xf]
    %v774 = vld [vmem:[#allocation10 + $0x38] sm:$0xf]
    %v775 = vld [vmem:[#allocation10 + $0x3c] sm:$0xf]
    %v776 = vld [vmem:[#allocation10 + $0x40] sm:$0xf]
    %v777 = vld [vmem:[#allocation10 + $0x44] sm:$0xf]
    %v778 = vld [vmem:[#allocation10 + $0x48] sm:$0xf]
    %v779 = vld [vmem:[#allocation10 + $0x4c] sm:$0xf]
    %v780 = vld [vmem:[#allocation10 + $0x50] sm:$0xf]
    %v781 = vld [vmem:[#allocation10 + $0x54] sm:$0xf]
    %v782 = vld [vmem:[#allocation10 + $0x58] sm:$0xf]
    %v783 = vld [vmem:[#allocation10 + $0x5c] sm:$0xf]
    %v784 = vld [vmem:[#allocation10 + $0x60] sm:$0xf]
    %v785 = vld [vmem:[#allocation10 + $0x64] sm:$0xf]
    %v786 = vld [vmem:[#allocation10 + $0x68] sm:$0xf]
    %v787 = vld [vmem:[#allocation10 + $0x6c] sm:$0xf]
    %v788 = vld [vmem:[#allocation10 + $0x70] sm:$0xf]
    %v789 = vld [vmem:[#allocation10 + $0x74] sm:$0xf]
    %v790 = vld [vmem:[#allocation10 + $0x78] sm:$0xf]
    %v791 = vld [vmem:[#allocation10 + $0x7c] sm:$0xf]
    %v792 = vld [vmem:[%s6] sm:$0x1]
    %v794 = vperm.slane %v792, 0
    %v828 = vunpack.c.l.b16 %v760
    %v829 = vunpack.c.l.b16 %v761
    %v830 = vunpack.c.l.b16 %v762
    %v831 = vunpack.c.l.b16 %v763
    %v832 = vunpack.c.l.b16 %v764
    %v833 = vunpack.c.l.b16 %v765
    %v834 = vunpack.c.l.b16 %v766
    %v835 = vunpack.c.l.b16 %v767
    %v836 = vunpack.c.l.b16 %v768
    %v837 = vunpack.c.l.b16 %v769
    %v838 = vunpack.c.l.b16 %v770
    %v839 = vunpack.c.l.b16 %v771
    %v840 = vunpack.c.l.b16 %v772
    %v841 = vunpack.c.l.b16 %v773
    %v842 = vunpack.c.l.b16 %v774
    %v843 = vunpack.c.l.b16 %v775
    %v844 = vunpack.c.l.b16 %v776
    %v845 = vunpack.c.l.b16 %v777
    %v846 = vunpack.c.l.b16 %v778
    %v847 = vunpack.c.l.b16 %v779
    %v848 = vunpack.c.l.b16 %v780
    %v849 = vunpack.c.l.b16 %v781
    %v850 = vunpack.c.l.b16 %v782
    %v851 = vunpack.c.l.b16 %v783
    %v852 = vunpack.c.l.b16 %v784
    %v853 = vunpack.c.l.b16 %v785
    %v854 = vunpack.c.l.b16 %v786
    %v855 = vunpack.c.l.b16 %v787
    %v856 = vunpack.c.l.b16 %v788
    %v857 = vunpack.c.l.b16 %v789
    %v858 = vunpack.c.l.b16 %v790
    %v859 = vunpack.c.l.b16 %v791
    %v860 = vpack.c.b16 %v829, %v828
    %v861 = vpack.c.b16 %v831, %v830
    %v862 = vpack.c.b16 %v833, %v832
    %v863 = vpack.c.b16 %v835, %v834
    %v864 = vpack.c.b16 %v837, %v836
    %v865 = vpack.c.b16 %v839, %v838
    %v866 = vpack.c.b16 %v841, %v840
    %v867 = vpack.c.b16 %v843, %v842
    %v868 = vpack.c.b16 %v845, %v844
    %v869 = vpack.c.b16 %v847, %v846
    %v870 = vpack.c.b16 %v849, %v848
    %v871 = vpack.c.b16 %v851, %v850
    %v872 = vpack.c.b16 %v853, %v852
    %v873 = vpack.c.b16 %v855, %v854
    %v874 = vpack.c.b16 %v857, %v856
    %v875 = vpack.c.b16 %v859, %v858
    %892 = vmatpush.bf16.msra.mxu0 %v867
    %893 = vmatpush.bf16.msra.mxu0 %v866
    %894 = vmatpush.bf16.msra.mxu0 %v865
    %895 = vmatpush.bf16.msra.mxu0 %v864
    %896 = vmatpush.bf16.msra.mxu0 %v863
    %897 = vmatpush.bf16.msra.mxu0 %v862
    %898 = vmatpush.bf16.msra.mxu0 %v861
    %899 = vmatpush.bf16.msra.mxu0 %v860
    %900 = vmatmul.bf16.gmra.mxu0 %v758
    %v901 = vpop.f32.mrf.mxu0
    %v902 = vadd.f32 %v794, %v901
    %v903 = vpop.f32.mrf.mxu0
    %904 = vdwg.mxu0
    %905 = vmatpush.bf16.msra.mxu0 %v875
    %906 = vmatpush.bf16.msra.mxu0 %v874
    %907 = vmatpush.bf16.msra.mxu0 %v873
    %908 = vmatpush.bf16.msra.mxu0 %v872
    %909 = vmatpush.bf16.msra.mxu0 %v871
    %910 = vmatpush.bf16.msra.mxu0 %v870
    %911 = vmatpush.bf16.msra.mxu0 %v869
    %912 = vmatpush.bf16.msra.mxu0 %v868
    %913 = vmatmul.bf16.gmra.mxu0 %v759
    %v914 = vpop.f32.mrf.mxu0
    %v915 = vadd.f32 %v902, %v914
    %v916 = vpop.f32.mrf.mxu0
    %917 = vdwg.mxu0
    %v918 = vmax.f32 %v915, 0.0
    %v919 = vlaneseq
    %v920 = vand.u32 %v919, 127
    %921 = vmax.xlane.f32.xlu0 %v918
    %v922 = vpop.xlane.xlu0 %921
    %vm923 = vcmp.lt.s32.totalorder %v920, 13
    %v924 = vsub.f32 %v918, %v922
    %v925 = vmul.f32 %v924, 1.442695
    %v926 = vpow.pop %v925
    %v927 = vsel %vm923, %v926, 0.0
    %928 = vadd.xlane.f32.xlu0 %v927
    %v929 = vpop.xlane.xlu0 %928
    %v930 = vrcp.pop %v929
    %v931 = vmul.f32 %v927, %v930
    %v932 = vcvt.s32.f32 %v920
    %v933 = vmul.f32 %v931, %v932
    %934 = vadd.xlane.f32.xlu0 %v933
    %v935 = vpop.xlane.xlu0 %934
    %vm936 = vcmp.eq.s32.totalorder %v920, 13
    %v937 = vsel %vm936, %v935, %v931
    %v938 = vpack.c.bf16 %v937, %v937
    %939 = vst [vmem:[#allocation11] sm:$0xf] %v938
    // Predicated region
    $region50: #{tpu_custom_call.1} parent=1 // pred_check
      _
    $region51: #{tpu_custom_call.1} parent=1 // pred_check_branch
      %941 = sbr.rel (0) target = $region53
    $region52: #{tpu_custom_call.1} parent=1 // pred_region
      %943 = vsyncadd [#allocation4], 0
      %s945 = sshll.u32 [#allocation11], 4
      %s946 = int_to_ptr.vmem [resolvable:$true] %s945
      %s947 = sshll.u32 %s7, 4
      %s948 = int_to_ptr.hbm [resolvable:$true] %s947
      %950 = dma.vmem_to_hbm [thread:$0]  %s946, 64, %s948, [#allocation4]
    $region53: #{tpu_custom_call.1} parent=1 // pred_fallthru
      _
    // Predicated region
    $region54: #{tpu_custom_call.1} parent=1 // pred_check
      _
    $region55: #{tpu_custom_call.1} parent=1 // pred_check_branch
      %952 = sbr.rel (0) target = $region57
    $region56: #{tpu_custom_call.1} parent=1 // pred_region
      %954 = dma.done [#allocation4], 64
    $region57: #{tpu_custom_call.1} parent=1 // pred_fallthru
      _
    %955 = vsyncpa [#allocation3], 1
    %956 = vsyncpa [#allocation6], 1
    %957 = vsyncpa [#allocation9], 1
    %958 = vsyncpa [#allocation4], 1

</llo_original>
